<compile_context>
chip_gen: v7x
topology: tpu7x:2x2x1
jax: 0.10.0
libtpu: 0.0.40
codegen_flags: <defaults>
</compile_context>

<pallas_src>
import math

import jax
import jax.numpy as jnp
from jax.experimental import pallas as pl
from jax.experimental.pallas import tpu as pltpu

LANES = 128
SUBLANES = 8
NUM_SLICES = 2            # leading "parallel" grid axis (megacore on v7x)
VMEM_LIMIT = 32 * 1024 * 1024


# --------------------------------------------------------------------------- #
# Tiling / padding helpers
# --------------------------------------------------------------------------- #
def _choose_tiling(total_elems, max_tile_r, slices=NUM_SLICES):
    """Pick a row tile (multiple of 8) and padded row count.

    Returns (tile_r, slices, steps, rows_padded) with
        rows_padded = slices * steps * tile_r.
    """
    rows = -(-total_elems // LANES)                      # ceil div
    tile_r = max_tile_r
    # shrink the tile for small tensors so padding stays negligible
    while tile_r > SUBLANES and slices * tile_r > rows:
        tile_r //= 2
    tile_r = max(SUBLANES, tile_r)
    rows_per_slice = -(-rows // (slices * tile_r)) * tile_r
    steps = rows_per_slice // tile_r
    rows_padded = slices * rows_per_slice
    return tile_r, slices, steps, rows_padded


def _pad_reshape(x, rows_padded, slices, pad_value):
    """Flatten x, pad with `pad_value` (kept in x's dtype) and reshape to
    (slices, rows_padded // slices, LANES)."""
    flat = jnp.ravel(x)
    total = flat.shape[0]
    padded_total = rows_padded * LANES
    if padded_total > total:
        pad = jnp.full((padded_total - total,), pad_value, flat.dtype)
        flat = jnp.concatenate([flat, pad])
    return flat.reshape(slices, rows_padded // slices, LANES)


def _fold_to_vreg(x, tile_r):
    """(tile_r, 128) -> (8, 128) partial sum using only VPU adds (the reshape
    groups whole (8,128) vreg tiles; summing over the leading axis is
    vreg-wise addition, no cross-lane XLU work)."""
    return jnp.sum(x.reshape(tile_r // SUBLANES, SUBLANES, LANES), axis=0)


# --------------------------------------------------------------------------- #
# Kernel 1: sum(log(y))   -- partial (8,128) accumulator per slice
# --------------------------------------------------------------------------- #
def _make_logsum_kernel(tile_r):
    def kernel(y_ref, out_ref):
        i = pl.program_id(1)

        @pl.when(i == 0)
        def _():
            out_ref[...] = jnp.zeros_like(out_ref)

        y = y_ref[...].astype(jnp.float32)
        out_ref[...] += _fold_to_vreg(jnp.log(y), tile_r)

    return kernel


def _sum_log(y, *, max_tile_r=2048):
    total = y.size
    tile_r, slices, steps, rows_padded = _choose_tiling(total, max_tile_r)
    # pad with 1.0 -> log(1) = 0 contribution
    y3 = _pad_reshape(y, rows_padded, slices, pad_value=1.0)

    partials = pl.pallas_call(
        _make_logsum_kernel(tile_r),
        out_shape=jax.ShapeDtypeStruct((slices, SUBLANES, LANES), jnp.float32),
        grid_spec=pltpu.PrefetchScalarGridSpec(
            num_scalar_prefetch=0,
            grid=(slices, steps),
            in_specs=[pl.BlockSpec((None, tile_r, LANES),
                                   lambda s, i: (s, i, 0))],
            out_specs=pl.BlockSpec((None, SUBLANES, LANES),
                                   lambda s, i: (s, 0, 0)),
        ),
        compiler_params=pltpu.CompilerParams(
            dimension_semantics=("parallel", "arbitrary"),
            vmem_limit_bytes=VMEM_LIMIT),
    )(y3)
    return jnp.sum(partials)                      # tiny final reduce in XLA


# --------------------------------------------------------------------------- #
# Kernel 2: distortion terms (three partial (8,128) accumulators per slice)
#   out[0] = sum( (mu - tgt)^2 * 0.5 / scale )   == sum((mu/sqrt(2s)-tgt/sqrt(2s))^2)
#   out[1] = sum( sqrt(scale) )
#   out[2] = sum( (f_hat - tgt)^2 )
# --------------------------------------------------------------------------- #
def _make_distortion_kernel(tile_r):
    def kernel(mu_ref, scale_ref, tgt_ref, fhat_ref, out_ref):
        i = pl.program_id(1)

        @pl.when(i == 0)
        def _():
            out_ref[...] = jnp.zeros_like(out_ref)

        mu = mu_ref[...].astype(jnp.float32)
        sc = scale_ref[...].astype(jnp.float32)
        tg = tgt_ref[...].astype(jnp.float32)
        fh = fhat_ref[...].astype(jnp.float32)

        diff = mu - tg
        info = (diff * diff) * (0.5 / sc)
        sqrt_s = jnp.sqrt(sc)
        fd = fh - tg
        fsq = fd * fd

        out_ref[0] += _fold_to_vreg(info, tile_r)
        out_ref[1] += _fold_to_vreg(sqrt_s, tile_r)
        out_ref[2] += _fold_to_vreg(fsq, tile_r)

    return kernel


def _distortion_sums(mu_hat, scale, target_f, f_hat, *, max_tile_r=1024):
    # NOTE: assumes mu_hat, scale, target_f, f_hat share a shape (no broadcast
    # of `scale`) and scale > 0, matching the PyTorch usage.
    total = mu_hat.size
    tile_r, slices, steps, rows_padded = _choose_tiling(total, max_tile_r)
    n_pad = rows_padded * LANES - total

    mu3 = _pad_reshape(mu_hat, rows_padded, slices, pad_value=0.0)
    sc3 = _pad_reshape(scale, rows_padded, slices, pad_value=1.0)  # sqrt(1)=1, corrected below
    tg3 = _pad_reshape(target_f, rows_padded, slices, pad_value=0.0)
    fh3 = _pad_reshape(f_hat, rows_padded, slices, pad_value=0.0)

    spec = pl.BlockSpec((None, tile_r, LANES), lambda s, i: (s, i, 0))
    partials = pl.pallas_call(
        _make_distortion_kernel(tile_r),
        out_shape=jax.ShapeDtypeStruct((slices, 3, SUBLANES, LANES), jnp.float32),
        grid_spec=pltpu.PrefetchScalarGridSpec(
            num_scalar_prefetch=0,
            grid=(slices, steps),
            in_specs=[spec, spec, spec, spec],
            out_specs=pl.BlockSpec((None, 3, SUBLANES, LANES),
                                   lambda s, i: (s, 0, 0, 0)),
        ),
        compiler_params=pltpu.CompilerParams(
            dimension_semantics=("parallel", "arbitrary"),
            vmem_limit_bytes=VMEM_LIMIT),
    )(mu3, sc3, tg3, fh3)

    sums = jnp.sum(partials, axis=(0, 2, 3))      # (3,) tiny final reduce
    info_sq_sum = sums[0]
    sqrt_scale_sum = sums[1] - jnp.float32(n_pad)  # remove sqrt(1)=1 pad contribution
    f_sq_sum = sums[2]
    return info_sq_sum, sqrt_scale_sum, f_sq_sum


# --------------------------------------------------------------------------- #
# RateDistortionLoss forward (metric='mse', return_type='all')
# --------------------------------------------------------------------------- #
def rate_distortion_loss(output, target_f, f_hat, d, lmbda=0.01):
    N, _, H, W = d.shape
    num_pixels = N * H * W

    out = {}

    # rate term: sum(log(y1_likelihoods)) / (-log(2) * num_pixels)
    log_sum = _sum_log(output['y1_likelihoods'])
    out['y_bpp_loss'] = log_sum / (-math.log(2) * num_pixels)

    # qloss: 3-element dot with log2([1,2,3]) -- trivial glue, not a hot path.
    logq = jnp.log(jnp.array([1.0, 2.0, 3.0], jnp.float32)) / math.log(2)
    out['qloss'] = jnp.dot(output['q1_f'].astype(jnp.float32), logq)

    # distortion terms
    info_sq_sum, sqrt_scale_sum, f_sq_sum = _distortion_sums(
        output['mu_hat'], output['scale'], target_f, f_hat)
    out['info_loss'] = info_sq_sum / jnp.float32(target_f.size) + sqrt_scale_sum
    out['f_loss'] = f_sq_sum / jnp.float32(f_hat.size)

    out['loss'] = (out['y_bpp_loss']
                   + 400 * 255 * 255 * lmbda * out['info_loss']
                   - out['qloss'])
    return out
    # TODO(synk): 'ms-ssim' metric branch of the PyTorch module is not implemented.


# --------------------------------------------------------------------------- #
if __name__ == "__main__":
    key = jax.random.PRNGKey(0)
    ks = jax.random.split(key, 6)

    N, C, H, W = 2, 4, 16, 16
    d        = jax.random.normal(ks[0], (N, C, H, W), jnp.float32)
    target_f = jax.random.normal(ks[1], (N, C, H, W), jnp.float32)
    f_hat    = jax.random.normal(ks[2], (N, C, H, W), jnp.float32)
    mu_hat   = jax.random.normal(ks[3], (N, C, H, W), jnp.float32)
    scale    = jax.nn.softplus(jax.random.normal(ks[4], (N, C, H, W), jnp.float32)) + 1e-3
    # likelihoods live in (0, 1]; deliberately NOT a multiple of 128 elements
    # to exercise the neutral-value padding path.
    y1 = jax.random.uniform(ks[5], (N, 5, 9, 9), jnp.float32, minval=1e-3, maxval=1.0)
    q1_f = jnp.array([0.2, 0.5, 0.3], jnp.float32)

    output = {'y1_likelihoods': y1, 'q1_f': q1_f, 'mu_hat': mu_hat, 'scale': scale}

    lmbda = 0.01
    res = rate_distortion_loss(output, target_f, f_hat, d, lmbda=lmbda)
    jax.block_until_ready(res)

    # ---- pure-JAX reference (mirrors the PyTorch forward) ----
    num_pixels = N * H * W
    logq = jnp.log(jnp.array([1.0, 2.0, 3.0], jnp.float32)) / math.log(2)
    ref = {}
    ref['y_bpp_loss'] = jnp.sum(jnp.log(y1)) / (-math.log(2) * num_pixels)
    ref['qloss'] = jnp.dot(q1_f, logq)
    ref['info_loss'] = (jnp.mean((mu_hat / jnp.sqrt(2 * scale)
                                  - target_f / jnp.sqrt(2 * scale)) ** 2)
                        + jnp.sum(jnp.sqrt(scale)))
    ref['f_loss'] = jnp.mean((f_hat - target_f) ** 2)
    ref['loss'] = (ref['y_bpp_loss']
                   + 400 * 255 * 255 * lmbda * ref['info_loss']
                   - ref['qloss'])

    for k in ('y_bpp_loss', 'qloss', 'info_loss', 'f_loss', 'loss'):
        got, want = float(res[k]), float(ref[k])
        assert abs(got - want) <= 1e-3 * (1.0 + abs(want)), (k, got, want)

    print("KERNEL_OK")
</pallas_src>

<mosaic_0001>
module attributes {stable_mosaic.version = 11 : i64} {
  func.func @kernel(%arg0: i32, %arg1: i32, %arg2: memref<1x8x128xf32, #tpu.memory_space<vmem>>, %arg3: memref<1x8x128xf32, #tpu.memory_space<vmem>>) attributes {dimension_semantics = [#tpu.dimension_semantics<parallel>, #tpu.dimension_semantics<arbitrary>], iteration_bounds = array<i64: 2, 1>, scalar_prefetch = 0 : i64, scratch_operands = 0 : i64, tpu.core_type = #tpu.core_type<tc>, window_params = [{transform_indices = @transform_0, window_bounds = array<i64: 1, 8, 128>}, {transform_indices = @transform_1, window_bounds = array<i64: 1, 8, 128>}]} {
    %c0_i32 = arith.constant 0 : i32
    %0 = arith.cmpi eq, %arg1, %c0_i32 : i32
    %1 = arith.extui %0 : i1 to i32
    %c0_i32_0 = arith.constant 0 : i32
    %2 = arith.cmpi ne, %1, %c0_i32_0 : i32
    scf.if %2 {
      %cst_9 = arith.constant 0.000000e+00 : f32
      %14 = vector.broadcast %cst_9 : f32 to vector<8x128xf32>
      %c0_10 = arith.constant 0 : index
      %c0_11 = arith.constant 0 : index
      %c0_12 = arith.constant 0 : index
      %15 = vector.load %arg3[%c0_10, %c0_11, %c0_12] : memref<1x8x128xf32, #tpu.memory_space<vmem>>, vector<1x8x128xf32>
      %16 = vector.shape_cast %15 : vector<1x8x128xf32> to vector<8x128xf32>
      %17 = vector.shape_cast %14 : vector<8x128xf32> to vector<1x8x128xf32>
      tpu.vector_store %arg3[%c0_10, %c0_11, %c0_12], %17 {strides = array<i32>} : memref<1x8x128xf32, #tpu.memory_space<vmem>>, vector<1x8x128xf32>,
    } else {
    }
    %c0 = arith.constant 0 : index
    %c0_1 = arith.constant 0 : index
    %c0_2 = arith.constant 0 : index
    %3 = vector.load %arg2[%c0, %c0_1, %c0_2] : memref<1x8x128xf32, #tpu.memory_space<vmem>>, vector<1x8x128xf32>
    %4 = vector.shape_cast %3 : vector<1x8x128xf32> to vector<8x128xf32>
    %c0_3 = arith.constant 0 : index
    %c0_4 = arith.constant 0 : index
    %c0_5 = arith.constant 0 : index
    %5 = vector.load %arg3[%c0_3, %c0_4, %c0_5] : memref<1x8x128xf32, #tpu.memory_space<vmem>>, vector<1x8x128xf32>
    %6 = vector.shape_cast %5 : vector<1x8x128xf32> to vector<8x128xf32>
    %7 = math.log %4 : vector<8x128xf32>
    %8 = vector.shape_cast %7 : vector<8x128xf32> to vector<1x8x128xf32>
    %cst = arith.constant dense<0.000000e+00> : vector<8x128xf32>
    %9 = vector.multi_reduction <add>, %8, %cst [0] : vector<1x8x128xf32> to vector<8x128xf32>
    %10 = arith.addf %6, %9 : vector<8x128xf32>
    %c0_6 = arith.constant 0 : index
    %c0_7 = arith.constant 0 : index
    %c0_8 = arith.constant 0 : index
    %11 = vector.load %arg3[%c0_6, %c0_7, %c0_8] : memref<1x8x128xf32, #tpu.memory_space<vmem>>, vector<1x8x128xf32>
    %12 = vector.shape_cast %11 : vector<1x8x128xf32> to vector<8x128xf32>
    %13 = vector.shape_cast %10 : vector<8x128xf32> to vector<1x8x128xf32>
    tpu.vector_store %arg3[%c0_6, %c0_7, %c0_8], %13 {strides = array<i32>} : memref<1x8x128xf32, #tpu.memory_space<vmem>>, vector<1x8x128xf32>,
    return
  }
  func.func @transform_0(%arg0: i32, %arg1: i32) -> (i32, i32, i32) {
    %c0_i32 = arith.constant 0 : i32
    %c0_i32_0 = arith.constant 0 : i32
    return %arg0, %arg1, %c0_i32 : i32, i32, i32
  }
  func.func @transform_1(%arg0: i32, %arg1: i32) -> (i32, i32, i32) {
    %c0_i32 = arith.constant 0 : i32
    %c0_i32_0 = arith.constant 0 : i32
    %c0_i32_1 = arith.constant 0 : i32
    return %arg0, %c0_i32, %c0_i32_0 : i32, i32, i32
  }
}

</mosaic_0001>

<llo_original>
// kernel: tpu_custom_call.1
$region0: #{tpu_custom_call.1}
  #allocation0 [shape = 'u32[]', space=smem, size = 0x4, offset = 0x4, fixed_abs, tag = 'smem constant byte address 0x4 - core index']
  #allocation1 [shape = 'u32[144,128]{1,0:T(1,128)}', space=vmem, size = 0x12000, scoped, tag = 'internal scratch']
  %s0 = inlined_call_operand.hbm [shape: f32[2,8,128], index: 0, kind: input, shape index: {}]
  %s1 = inlined_call_operand.hbm [shape: f32[2,8,128], index: 1, kind: output, shape index: {}]
  %s2 = sld [smem:[#allocation0]]
  $region45: #{tpu_custom_call.1} parent=0
    _
  %s4 = ssub.s32 1, %s2
  %s5 = scalar_select 0, %s4, %s2
  $region1: #{tpu_custom_call.1} parent=0
    #allocation2 [shape = 'u8[8192]{0}', space=vmem, size = 0x2000, scoped, tag = 'input window, operand 0']
    #allocation3 [shape = 's32[2]{0}', space=sflag, size = 0x8, scoped, tag = 'scoped memory for tpu_custom_call.1']
    #allocation4 [shape = 's32[2]{0}', space=sflag, size = 0x8, scoped, tag = 'scoped memory for tpu_custom_call.1']
    #allocation5 [shape = 'u8[8192]{0}', space=vmem, size = 0x2000, scoped, tag = 'output window, operand 0']
    %6 = vsyncpa [#allocation3], 0
    %s7 = scalar_lea.sflag [#allocation3], 1
    %8 = vsyncpa %s7, 0
    %9 = vsyncpa [#allocation4], 0
    %s10 = scalar_lea.sflag [#allocation4], 1
    %11 = vsyncpa %s10, 0
    loop: start=0, step=1, limit=4
    $region2: #{tpu_custom_call.1} parent=1 // loop_pre_header
      _
    $region3: #{tpu_custom_call.1} parent=1 // loop_header
      %s13 = sphi 0, %s17
      %p14 = scmp.ge.s32.totalorder %s13, 4
      %s20 = sphi 0, %s32
      %s21 = sphi 0, %s28
      %s22 = sphi 0, %s20
      %s23 = sphi 0, %s21
      %s24 = sphi 0, %s22
      %s25 = sphi 0, %s23
      %s37 = sphi 0, %s39
      %s40 = sphi 0, %s37
      %s41 = sphi 0, %s40
      %s57 = sphi 0, %s41
      %s63 = sphi 0, %s65
      %s66 = sphi 0, %s63
      %s67 = sphi 0, %s66
      %s83 = sphi 0, %s67
    $region4: #{tpu_custom_call.1} parent=1 // loop_header_branch
      %16 = sbr.rel (%p14) target = $region8
    $region5: #{tpu_custom_call.1} parent=1 // loop_body
      %s18 = ssub.s32 %s13, 1
      %s19 = ssub.s32 %s13, 2
      %s26 = sadd.s32 1, %s21
      %p27 = scmp.ge.s32.totalorder %s26, 1
      %s28 = scalar_select %p27, 0, %s26
      %s29 = sadd.s32 1, %s20
      %s30 = scalar_select %p27, %s29, %s20
      %p31 = scmp.ge.s32.totalorder %s30, 2
      %s32 = scalar_select %p31, 0, %s30
      %s33 = ssub.s32 %s20, %s32
      %s34 = ssub.s32 %s21, %s28
      %s35 = sor.u32 %s33, %s34
      %p36 = scmp.eq.s32.totalorder %s35, 0
      %s38 = sadd.s32 %s37, 1
      %s39 = scalar_select %p36, %s37, %s38
      %p42 = pneg %p36
      %p43 = scmp.eq.s32.totalorder %s13, 1
      %p44 = por %p42, %p43
      %p45 = scmp.ne.s32.totalorder %s37, %s40
      %p46 = scmp.eq.s32.totalorder %s13, 0
      %p47 = por %p45, %p46
      %p48 = scmp.ne.s32.totalorder %s37, %s40
      %p49 = scmp.eq.s32.totalorder %s18, 1
      %p50 = por %p48, %p49
      %p51 = scmp.ne.s32.totalorder %s40, %s41
      %p52 = scmp.eq.s32.totalorder %s18, 0
      %p53 = por %p51, %p52
      %p54 = scmp.ne.s32.totalorder %s40, %s41
      %p55 = scmp.eq.s32.totalorder %s19, 1
      %p56 = por %p54, %p55
      %p58 = scmp.ne.s32.totalorder %s41, %s57
      %p59 = scmp.eq.s32.totalorder %s19, 0
      %p60 = por %p58, %p59
      %s61 = ssub.s32 %s20, %s32
      %p62 = scmp.eq.s32.totalorder %s61, 0
      %s64 = sadd.s32 %s63, 1
      %s65 = scalar_select %p62, %s63, %s64
      %p68 = pneg %p62
      %p69 = scmp.eq.s32.totalorder %s13, 1
      %p70 = por %p68, %p69
      %p71 = scmp.ne.s32.totalorder %s63, %s66
      %p72 = scmp.eq.s32.totalorder %s13, 0
      %p73 = por %p71, %p72
      %p74 = scmp.ne.s32.totalorder %s63, %s66
      %p75 = scmp.eq.s32.totalorder %s18, 1
      %p76 = por %p74, %p75
      %p77 = scmp.ne.s32.totalorder %s66, %s67
      %p78 = scmp.eq.s32.totalorder %s18, 0
      %p79 = por %p77, %p78
      %p80 = scmp.ne.s32.totalorder %s66, %s67
      %p81 = scmp.eq.s32.totalorder %s19, 1
      %p82 = por %p80, %p81
      %p84 = scmp.ne.s32.totalorder %s67, %s83
      %p85 = scmp.eq.s32.totalorder %s19, 0
      %p86 = por %p84, %p85
      %p87 = scmp.le.s32.totalorder 1, %s13
      %p88 = scmp.lt.s32.totalorder %s13, 3
      %p89 = pnand %p87, %p88
      %p90 = pneg %p89
      // Predicated region
      $region9: #{tpu_custom_call.1} parent=5 // pred_check
        _
      $region10: #{tpu_custom_call.1} parent=5 // pred_check_branch
        %92 = sbr.rel (%p89) target = $region12
      $region11: #{tpu_custom_call.1} parent=5 // pred_region
        %s93 = ssub.s32 %s13, 1
      $region12: #{tpu_custom_call.1} parent=5 // pred_fallthru
        _
      %p94 = scmp.lt.s32.totalorder %s13, 2
      // Predicated region
      $region13: #{tpu_custom_call.1} parent=5 // pred_check
        %p95 = pneg %p94
      $region14: #{tpu_custom_call.1} parent=5 // pred_check_branch
        %97 = sbr.rel (%p95) target = $region16
      $region15: #{tpu_custom_call.1} parent=5 // pred_region
        // Predicated region
        $region17: #{tpu_custom_call.1} parent=15 // pred_check
          %p98 = pneg %p47
        $region18: #{tpu_custom_call.1} parent=15 // pred_check_branch
          %100 = sbr.rel (%p98) target = $region20
        $region19: #{tpu_custom_call.1} parent=15 // pred_region
          %s101 = sand.u32 %s37, 1
          %s102 = scalar_lea.sflag [#allocation3], %s101
          %s103 = sand.u32 %s37, 1
          %s104 = smul.addr %s103, 8
          %s105 = scalar_lea.vmem [#allocation2], %s104
          %s107 = ssub.s32 128, 128
          %108 = vsyncadd %s102, %s107
          %s109 = sadd.s32 %s21, %s20
          %s110 = smul.addr %s109, 128
          %s111 = scalar_lea.hbm %s0, %s110
          %s113 = sshll.u32 %s105, 4
          %s114 = int_to_ptr.vmem [resolvable:$true] %s113
          %116 = dma.hbm_to_vmem [thread:$0]  %s111, 128, %s114, %s102
        $region20: #{tpu_custom_call.1} parent=15 // pred_fallthru
          _
      $region16: #{tpu_custom_call.1} parent=5 // pred_fallthru
        _
      %p117 = scmp.le.s32.totalorder 1, %s13
      %p118 = scmp.lt.s32.totalorder %s13, 3
      %p119 = pnand %p117, %p118
      %p120 = pneg %p119
      // Predicated region
      $region21: #{tpu_custom_call.1} parent=5 // pred_check
        _
      $region22: #{tpu_custom_call.1} parent=5 // pred_check_branch
        %122 = sbr.rel (%p119) target = $region24
      $region23: #{tpu_custom_call.1} parent=5 // pred_region
        %s123 = ssub.s32 %s13, 1
        %s124 = sand.u32 %s40, 1
        %s125 = scalar_lea.sflag [#allocation3], %s124
        %s126 = sand.u32 %s40, 1
        %s127 = smul.addr %s126, 8
        %s128 = scalar_lea.vmem [#allocation2], %s127
        // Predicated region
        $region25: #{tpu_custom_call.1} parent=23 // pred_check
          %p129 = pneg %p53
        $region26: #{tpu_custom_call.1} parent=23 // pred_check_branch
          %131 = sbr.rel (%p129) target = $region28
        $region27: #{tpu_custom_call.1} parent=23 // pred_region
          %132 = dma.done %s125, 128
        $region28: #{tpu_custom_call.1} parent=23 // pred_fallthru
          _
        %s133 = sand.u32 %s40, 1
        %s134 = scalar_lea.sflag [#allocation3], %s133
        %s135 = sand.u32 %s40, 1
        %s136 = smul.addr %s135, 8
        %s137 = scalar_lea.vmem [#allocation2], %s136
        %p138 = pneg %p53
        %p139 = pneg %p50
        %p140 = pneg %p79
        %p141 = pneg %p76
        %s142 = sand.u32 %s66, 1
        %s143 = scalar_lea.sflag [#allocation4], %s142
        %s144 = sand.u32 %s66, 1
        %s145 = smul.addr %s144, 8
        %s146 = scalar_lea.vmem [#allocation5], %s145
        %p147 = scmp.eq.s32.totalorder %s23, 0
        // Predicated region
        $region29: #{tpu_custom_call.1} parent=23 // pred_check
          %p148 = pneg %p147
        $region30: #{tpu_custom_call.1} parent=23 // pred_check_branch
          %150 = sbr.rel (%p148) target = $region32
        $region31: #{tpu_custom_call.1} parent=23 // pred_region
          %151 = vst [vmem:[%s146] sm:$0xff] 0.0
        $region32: #{tpu_custom_call.1} parent=23 // pred_fallthru
          _
        %v152 = vld [vmem:[%s128] sm:$0xff]
        %v153 = vld [vmem:[%s146] sm:$0xff]
        %v154 = vlog2.pop %v152
        %v155 = vmul.f32 %v154, 0.6931472
        %v156 = vadd.f32 %v155, 0.0
        %v157 = vadd.f32 %v153, %v156
        %158 = vst [vmem:[%s146] sm:$0xff] %v157
        %s159 = sand.u32 %s66, 1
        %s160 = scalar_lea.sflag [#allocation4], %s159
        %s161 = sand.u32 %s66, 1
        %s162 = smul.addr %s161, 8
        %s163 = scalar_lea.vmem [#allocation5], %s162
        // Predicated region
        $region33: #{tpu_custom_call.1} parent=23 // pred_check
          %p164 = pneg %p76
        $region34: #{tpu_custom_call.1} parent=23 // pred_check_branch
          %166 = sbr.rel (%p164) target = $region36
        $region35: #{tpu_custom_call.1} parent=23 // pred_region
          %s168 = ssub.s32 128, 128
          %169 = vsyncadd %s160, %s168
          %s170 = smul.addr %s22, 128
          %s171 = scalar_lea.hbm %s1, %s170
          %s173 = sshll.u32 %s163, 4
          %s174 = int_to_ptr.vmem [resolvable:$true] %s173
          %176 = dma.vmem_to_hbm [thread:$0]  %s174, 128, %s171, %s160
        $region36: #{tpu_custom_call.1} parent=23 // pred_fallthru
          _
      $region24: #{tpu_custom_call.1} parent=5 // pred_fallthru
        _
      %p177 = scmp.le.s32.totalorder 2, %s13
      // Predicated region
      $region37: #{tpu_custom_call.1} parent=5 // pred_check
        %p178 = pneg %p177
      $region38: #{tpu_custom_call.1} parent=5 // pred_check_branch
        %180 = sbr.rel (%p178) target = $region40
      $region39: #{tpu_custom_call.1} parent=5 // pred_region
        %s181 = ssub.s32 %s13, 2
        // Predicated region
        $region41: #{tpu_custom_call.1} parent=39 // pred_check
          %p182 = pneg %p82
        $region42: #{tpu_custom_call.1} parent=39 // pred_check_branch
          %184 = sbr.rel (%p182) target = $region44
        $region43: #{tpu_custom_call.1} parent=39 // pred_region
          %s185 = sand.u32 %s67, 1
          %s186 = scalar_lea.sflag [#allocation4], %s185
          %s187 = sand.u32 %s67, 1
          %s188 = smul.addr %s187, 8
          %s189 = scalar_lea.vmem [#allocation5], %s188
          %190 = dma.done %s186, 128
        $region44: #{tpu_custom_call.1} parent=39 // pred_fallthru
          _
      $region40: #{tpu_custom_call.1} parent=5 // pred_fallthru
        _
    $region6: #{tpu_custom_call.1} parent=1 // loop_footer
      %s17 = sadd.s32 1, %s13
    $region7: #{tpu_custom_call.1} parent=1 // loop_footer_branch
      %12 = sbr.rel target = $region3
    $region8: #{tpu_custom_call.1} parent=1 // loop_exit
      _
    %191 = vsyncpa [#allocation3], 1
    %s192 = scalar_lea.sflag [#allocation3], 1
    %193 = vsyncpa %s192, 1
    %194 = vsyncpa [#allocation4], 1
    %s195 = scalar_lea.sflag [#allocation4], 1
    %196 = vsyncpa %s195, 1

</llo_original>
